<compile_context>
chip_gen: v6e
topology: v6e:2x2x1
jax: 0.10.0
libtpu: 0.0.40
codegen_flags: <defaults>
</compile_context>

<pallas_src>
import functools

import jax
import jax.numpy as jnp
from jax import lax
from jax.experimental import pallas as pl
from jax.experimental.pallas import tpu as pltpu

LANES = 128
SUBLANES = 8
_NUM_SUMS = 6  # Σd², Σ|d|, Σd, Σfa, Σfa², Σ(fa·d)


def _round_up(x, m):
    return (x + m - 1) // m * m


def _device_kind():
    try:
        return jax.devices()[0].device_kind.lower()
    except Exception:
        return ""


def _default_tile_rows():
    kind = _device_kind()
    # v5e: stay inside the 16 MiB default scoped-VMEM budget (3 inputs x 2
    # buffers x 1 MiB = 6 MiB).  v6e / v7x / v5p: 4096 rows -> ~12.6 MiB of
    # double-buffered f32 inputs, under their 32 MiB scoped default (an
    # explicit vmem_limit_bytes is set below in any case).
    if "v5 lite" in kind or "v5e" in kind or "v5lite" in kind:
        return 2048
    return 4096


def _tensorcores_per_device():
    kind = _device_kind()
    # v7x exposes 2 TensorCores per chip; v5e/v6e have one.
    return 2 if ("v7" in kind or "7x" in kind) else 1


def _loss_sums_kernel(nrows_ref, scale_ref, o_ref, t_ref, c_ref, acc_ref, *,
                      tile_rows, chunk_rows, tiles_per_split):
    jj = pl.program_id(1)          # row-tile reduction axis ("arbitrary")

    @pl.when(jj == 0)
    def _init():
        acc_ref[...] = jnp.zeros_like(acc_ref)

    std = scale_ref[0]
    nrows = nrows_ref[0]
    # Unclamped global tile index (the data index_map may clamp for DMA safety
    # when the reduction range is split across cores; overrun tiles are fully
    # masked here so they contribute zero).
    tile_start = (pl.program_id(0) * tiles_per_split + jj) * tile_rows
    n_chunks = tile_rows // chunk_rows

    def vsum(x):
        # (chunk_rows, 128) -> (8, 128): pure VPU vreg adds; the single
        # expensive cross-lane reduction happens once, in the JAX epilogue.
        return jnp.sum(x.reshape(-1, SUBLANES, LANES), axis=0)

    def accumulate(masked):
        s = [jnp.zeros((SUBLANES, LANES), jnp.float32) for _ in range(_NUM_SUMS)]
        # Fully unrolled chunk loop with *static* slice offsets (zero-cost
        # slicing): the live working set is one (chunk_rows, 128) slab per
        # input instead of (tile_rows, 128) d / fa temporaries in VMEM.
        for ci in range(n_chunks):
            r0 = ci * chunk_rows
            o = o_ref[pl.ds(r0, chunk_rows), :].astype(jnp.float32)
            t = t_ref[pl.ds(r0, chunk_rows), :].astype(jnp.float32)
            c = c_ref[pl.ds(r0, chunk_rows), :].astype(jnp.float32)
            d = o - t
            # '+ mean' dropped: ACC is invariant to a constant shift, and the
            # smaller offsets improve f32 accuracy of the single-pass moments.
            fa = o * std - c
            if masked:
                rid = tile_start + r0 + lax.broadcasted_iota(
                    jnp.int32, (chunk_rows, LANES), 0)
                keep = rid < nrows
                d = jnp.where(keep, d, 0.0)
                fa = jnp.where(keep, fa, 0.0)
            s[0] = s[0] + vsum(d * d)
            s[1] = s[1] + vsum(jnp.abs(d))
            s[2] = s[2] + vsum(d)
            s[3] = s[3] + vsum(fa)
            s[4] = s[4] + vsum(fa * fa)
            s[5] = s[5] + vsum(fa * d)
        for k in range(_NUM_SUMS):
            acc_ref[k] += s[k]

    # Only tiles that overrun the valid row range pay for the row mask
    # (iota + compare + selects); interior tiles take the cheap path.
    @pl.when(tile_start + tile_rows <= nrows)
    def _full_tile():
        accumulate(masked=False)

    @pl.when(tile_start + tile_rows > nrows)
    def _edge_tile():
        accumulate(masked=True)


def weighted_mse_mae_acc_loss(output, target, clim, std, mean, *,
                              tile_rows=None, chunk_rows=512,
                              _force_splits=None):
    """output, target, clim: 1-D arrays of length N (any N; f32 or bf16).

    `mean` is accepted for API fidelity with the PyTorch module, but the loss
    is mathematically independent of it (ACC is shift-invariant), so it is
    unused in the computation.
    """
    del mean
    n_total = int(output.shape[0])
    stdf = jnp.float32(std)

    n_main = (n_total // LANES) * LANES           # lane-aligned kernel prefix
    sums = jnp.zeros((_NUM_SUMS,), jnp.float32)

    if n_main > 0:
        rows = n_main // LANES
        itemsize = jnp.dtype(output.dtype).itemsize

        def as_2d(x):
            x = x.reshape(-1)
            if n_main != n_total:
                x = x[:n_main]                    # prefix slice -- no padded copy
            return x.reshape(rows, LANES)

        o2, t2, c2 = as_2d(output), as_2d(target), as_2d(clim)

        # Sublane granularity: 8 rows for 32-bit dtypes, 16 for 16-bit, ...
        sub = SUBLANES * max(1, 4 // itemsize)
        rows_up = _round_up(rows, sub)
        if tile_rows is None:
            tile_rows = _default_tile_rows()
        chunk = max(sub, _round_up(min(int(chunk_rows), int(tile_rows), rows_up), sub))
        tr = max(chunk, _round_up(min(int(tile_rows), rows_up), chunk))
        n_tiles = -(-rows // tr)

        n_cores = _tensorcores_per_device()
        if _force_splits is not None:
            n_splits = max(1, min(int(_force_splits), n_tiles))
        else:
            n_splits = n_cores if n_tiles >= n_cores else 1
        use_core_parallel = (n_splits > 1) and (n_cores > 1)

        nrows_arr = jnp.asarray([rows], jnp.int32)     # valid rows (runtime mask)
        scale_arr = jnp.asarray([std], jnp.float32)    # std as a dynamic scalar

        # ~13 VPU flops / element; the kernel is HBM-bandwidth bound.
        cost = pl.CostEstimate(
            flops=13 * n_main,
            transcendentals=0,
            bytes_accessed=3 * n_main * itemsize + _NUM_SUMS * SUBLANES * LANES * 4)
        # 3 inputs x 2 pipeline buffers per step + headroom for the chunk
        # working set and the resident accumulator.
        vmem_limit = int(2 * 3 * tr * LANES * itemsize + (8 << 20))

        def run(splits, core_parallel):
            tiles_per_split = -(-n_tiles // splits)
            last_tile = n_tiles - 1
            if splits == 1:
                data_map = lambda cc, jj: (jj, 0)
            else:
                # Clamp so the DMA never addresses past the array; overrun
                # tiles are zeroed inside the kernel via the *unclamped*
                # global tile index.
                data_map = lambda cc, jj: (
                    jnp.minimum(cc * tiles_per_split + jj, last_tile), 0)

            data_spec = pl.BlockSpec((tr, LANES), data_map)
            smem_spec = pl.BlockSpec(memory_space=pltpu.MemorySpace.SMEM)
            # Output block is the per-core (6,8,128) vector accumulator,
            # resident across the "arbitrary" reduction axis.
            out_spec = pl.BlockSpec((None, _NUM_SUMS, SUBLANES, LANES),
                                    lambda cc, jj: (cc, 0, 0, 0))
            kernel = functools.partial(
                _loss_sums_kernel, tile_rows=tr, chunk_rows=chunk,
                tiles_per_split=tiles_per_split)
            if core_parallel:
                dims = (pltpu.CORE_PARALLEL, pltpu.ARBITRARY)   # v7x: 2 TCs
            else:
                dims = ("arbitrary", "arbitrary")
            return pl.pallas_call(
                kernel,
                out_shape=jax.ShapeDtypeStruct(
                    (splits, _NUM_SUMS, SUBLANES, LANES), jnp.float32),
                grid_spec=pltpu.PrefetchScalarGridSpec(
                    num_scalar_prefetch=0,
                    grid=(splits, tiles_per_split),
                    in_specs=[smem_spec,   # [rows_valid]
                              smem_spec,   # [std]
                              data_spec,   # output
                              data_spec,   # target
                              data_spec],  # clim
                    out_specs=out_spec,
                ),
                compiler_params=pltpu.CompilerParams(
                    dimension_semantics=dims,
                    vmem_limit_bytes=vmem_limit),
                cost_estimate=cost,
            )(nrows_arr, scale_arr, o2, t2, c2)

        if n_splits > 1:
            try:
                partials = run(n_splits, use_core_parallel)
            except Exception:  # conservative fallback to the single-core path
                partials = run(1, False)
        else:
            partials = run(1, False)

        # Single cross-lane reduction for the whole array.
        sums = jnp.sum(partials, axis=(0, 2, 3))                 # (6,)

    if n_main != n_total:
        # Ragged tail (< 128 elements): plain JAX -- avoids padding/copying the
        # full inputs and keeps the kernel's hot path mask-free.
        o_t = output.reshape(-1)[n_main:].astype(jnp.float32)
        t_t = target.reshape(-1)[n_main:].astype(jnp.float32)
        c_t = clim.reshape(-1)[n_main:].astype(jnp.float32)
        d_t = o_t - t_t
        fa_t = o_t * stdf - c_t
        sums = sums + jnp.stack([
            jnp.sum(d_t * d_t), jnp.sum(jnp.abs(d_t)), jnp.sum(d_t),
            jnp.sum(fa_t), jnp.sum(fa_t * fa_t), jnp.sum(fa_t * d_t)])

    # ---- scalar epilogue (~20 flops) ----
    s_dd, s_ad, s_d, s_f, s_ff, s_fd = (sums[i] for i in range(_NUM_SUMS))
    n = jnp.float32(n_total)
    # a = t*std - c = fa - std*d  ->  derived sums:
    s_a = s_f - stdf * s_d
    s_aa = s_ff - 2.0 * stdf * s_fd + stdf * stdf * s_dd
    s_faa = s_ff - stdf * s_fd

    mse = s_dd / n
    mae = s_ad / n
    cov = s_faa - s_f * s_a / n
    var_f = s_ff - s_f * s_f / n
    var_a = s_aa - s_a * s_a / n
    # TODO(synk): no guard against zero variance (constant fields); matches the
    # reference module's behavior (would produce inf/nan).
    acc_corr = cov / jnp.sqrt(var_f * var_a)
    return mse + mae + (1.0 - acc_corr)


def _reference(output, target, clim, std, mean):
    o = output.astype(jnp.float32)
    t = target.astype(jnp.float32)
    c = clim.astype(jnp.float32)
    mse = jnp.mean((o - t) ** 2)
    mae = jnp.mean(jnp.abs(o - t))
    fa = o * std + mean - c
    a = t * std + mean - c
    fap = fa - jnp.mean(fa)
    ap = a - jnp.mean(a)
    acc = jnp.sum(fap * ap) / jnp.sqrt(jnp.sum(fap ** 2) * jnp.sum(ap ** 2))
    return mse + mae + (1.0 - acc)


if __name__ == "__main__":
    # Deterministic "module parameters" (self.std / self.mean are set externally
    # on the original module; synthetic deterministic values here).
    STD = 2.5
    MEAN = 0.3

    # Ragged 1-D inputs on purpose: 67 full 128-lane rows + a 37-element tail,
    # exercising the kernel prefix, the masked edge tile and the JAX tail.
    N = 8613
    key = jax.random.PRNGKey(0)
    k1, k2, k3 = jax.random.split(key, 3)
    output = jax.random.normal(k1, (N,), jnp.float32)
    target = jax.random.normal(k2, (N,), jnp.float32)
    clim = jax.random.normal(k3, (N,), jnp.float32)

    ref = jax.block_until_ready(_reference(output, target, clim, STD, MEAN))

    # 1) default per-generation tiling (single tile here).
    loss = jax.block_until_ready(
        weighted_mse_mae_acc_loss(output, target, clim, STD, MEAN))
    assert jnp.allclose(loss, ref, rtol=1e-4, atol=1e-4), (loss, ref)

    # 2) tiny tiles: multi-step grid, chunked accumulation, masked final tile.
    loss2 = jax.block_until_ready(
        weighted_mse_mae_acc_loss(output, target, clim, STD, MEAN,
                                  tile_rows=16, chunk_rows=8))
    assert jnp.allclose(loss2, ref, rtol=1e-4, atol=1e-4), (loss2, ref)

    # 3) forced 2-way split of the reduction range (v7x core-split code path:
    #    clamped index_map + per-split accumulators + epilogue combine).
    loss3 = jax.block_until_ready(
        weighted_mse_mae_acc_loss(output, target, clim, STD, MEAN,
                                  tile_rows=16, chunk_rows=8, _force_splits=2))
    assert jnp.allclose(loss3, ref, rtol=1e-4, atol=1e-4), (loss3, ref)

    print("KERNEL_OK")
</pallas_src>

<mosaic_0001>
module attributes {stable_mosaic.version = 11 : i64} {
  func.func @_loss_sums_kernel(%arg0: i32, %arg1: i32, %arg2: memref<1xi32, #tpu.memory_space<smem>>, %arg3: memref<1xf32, #tpu.memory_space<smem>>, %arg4: memref<72x128xf32, #tpu.memory_space<vmem>>, %arg5: memref<72x128xf32, #tpu.memory_space<vmem>>, %arg6: memref<72x128xf32, #tpu.memory_space<vmem>>, %arg7: memref<1x6x8x128xf32, #tpu.memory_space<vmem>>) attributes {dimension_semantics = [#tpu.dimension_semantics<arbitrary>, #tpu.dimension_semantics<arbitrary>], iteration_bounds = array<i64: 1, 1>, scalar_prefetch = 0 : i64, scratch_operands = 0 : i64, tpu.core_type = #tpu.core_type<tc>, window_params = [{transform_indices = @transform_0, window_bounds = array<i64: 1>}, {transform_indices = @transform_1, window_bounds = array<i64: 1>}, {transform_indices = @transform_2, window_bounds = array<i64: 72, 128>}, {transform_indices = @transform_3, window_bounds = array<i64: 72, 128>}, {transform_indices = @transform_4, window_bounds = array<i64: 72, 128>}, {transform_indices = @transform_5, window_bounds = array<i64: 1, 6, 8, 128>}]} {
    %c0_i32 = arith.constant 0 : i32
    %0 = arith.cmpi eq, %arg1, %c0_i32 : i32
    %1 = arith.extui %0 : i1 to i32
    %c0_i32_0 = arith.constant 0 : i32
    %2 = arith.cmpi ne, %1, %c0_i32_0 : i32
    scf.if %2 {
      %cst = arith.constant 0.000000e+00 : f32
      %16 = vector.broadcast %cst : f32 to vector<6x8x128xf32>
      %c0_6 = arith.constant 0 : index
      %c0_7 = arith.constant 0 : index
      %c0_8 = arith.constant 0 : index
      %c0_9 = arith.constant 0 : index
      %17 = vector.load %arg7[%c0_6, %c0_7, %c0_8, %c0_9] : memref<1x6x8x128xf32, #tpu.memory_space<vmem>>, vector<1x6x8x128xf32>
      %18 = vector.shape_cast %17 : vector<1x6x8x128xf32> to vector<6x8x128xf32>
      %19 = vector.shape_cast %16 : vector<6x8x128xf32> to vector<1x6x8x128xf32>
      tpu.vector_store %arg7[%c0_6, %c0_7, %c0_8, %c0_9], %19 {strides = array<i32>} : memref<1x6x8x128xf32, #tpu.memory_space<vmem>>, vector<1x6x8x128xf32>,
    } else {
    }
    %c0 = arith.constant 0 : index
    %3 = memref.load %arg3[%c0] : memref<1xf32, #tpu.memory_space<smem>>
    %c0_1 = arith.constant 0 : index
    %4 = memref.load %arg2[%c0_1] : memref<1xi32, #tpu.memory_space<smem>>
    %c1_i32 = arith.constant 1 : i32
    %5 = arith.muli %arg0, %c1_i32 : i32
    %6 = arith.addi %5, %arg1 : i32
    %c72_i32 = arith.constant 72 : i32
    %7 = arith.muli %6, %c72_i32 : i32
    %c72_i32_2 = arith.constant 72 : i32
    %8 = arith.addi %7, %c72_i32_2 : i32
    %9 = arith.cmpi sle, %8, %4 : i32
    %10 = arith.extui %9 : i1 to i32
    %c0_i32_3 = arith.constant 0 : i32
    %11 = arith.cmpi ne, %10, %c0_i32_3 : i32
    scf.if %11 {
      %cst = arith.constant 0.000000e+00 : f32
      %16 = vector.broadcast %cst : f32 to vector<8x128xf32>
      %cst_6 = arith.constant 0.000000e+00 : f32
      %17 = vector.broadcast %cst_6 : f32 to vector<8x128xf32>
      %cst_7 = arith.constant 0.000000e+00 : f32
      %18 = vector.broadcast %cst_7 : f32 to vector<8x128xf32>
      %cst_8 = arith.constant 0.000000e+00 : f32
      %19 = vector.broadcast %cst_8 : f32 to vector<8x128xf32>
      %cst_9 = arith.constant 0.000000e+00 : f32
      %20 = vector.broadcast %cst_9 : f32 to vector<8x128xf32>
      %cst_10 = arith.constant 0.000000e+00 : f32
      %21 = vector.broadcast %cst_10 : f32 to vector<8x128xf32>
      %c0_11 = arith.constant 0 : index
      %c0_12 = arith.constant 0 : index
      %22 = vector.load %arg4[%c0_11, %c0_12] : memref<72x128xf32, #tpu.memory_space<vmem>>, vector<72x128xf32>
      %c0_13 = arith.constant 0 : index
      %c0_14 = arith.constant 0 : index
      %23 = vector.load %arg5[%c0_13, %c0_14] : memref<72x128xf32, #tpu.memory_space<vmem>>, vector<72x128xf32>
      %c0_15 = arith.constant 0 : index
      %c0_16 = arith.constant 0 : index
      %24 = vector.load %arg6[%c0_15, %c0_16] : memref<72x128xf32, #tpu.memory_space<vmem>>, vector<72x128xf32>
      %25 = arith.subf %22, %23 : vector<72x128xf32>
      %26 = vector.broadcast %3 : f32 to vector<72x128xf32>
      %27 = arith.mulf %22, %26 : vector<72x128xf32>
      %28 = arith.subf %27, %24 : vector<72x128xf32>
      %29 = arith.mulf %25, %25 : vector<72x128xf32>
      %30 = vector.shape_cast %29 : vector<72x128xf32> to vector<9x8x128xf32>
      %cst_17 = arith.constant dense<0.000000e+00> : vector<8x128xf32>
      %31 = vector.multi_reduction <add>, %30, %cst_17 [0] : vector<9x8x128xf32> to vector<8x128xf32>
      %32 = arith.addf %16, %31 : vector<8x128xf32>
      %33 = math.absf %25 : vector<72x128xf32>
      %34 = vector.shape_cast %33 : vector<72x128xf32> to vector<9x8x128xf32>
      %cst_18 = arith.constant dense<0.000000e+00> : vector<8x128xf32>
      %35 = vector.multi_reduction <add>, %34, %cst_18 [0] : vector<9x8x128xf32> to vector<8x128xf32>
      %36 = arith.addf %17, %35 : vector<8x128xf32>
      %37 = vector.shape_cast %25 : vector<72x128xf32> to vector<9x8x128xf32>
      %cst_19 = arith.constant dense<0.000000e+00> : vector<8x128xf32>
      %38 = vector.multi_reduction <add>, %37, %cst_19 [0] : vector<9x8x128xf32> to vector<8x128xf32>
      %39 = arith.addf %18, %38 : vector<8x128xf32>
      %40 = vector.shape_cast %28 : vector<72x128xf32> to vector<9x8x128xf32>
      %cst_20 = arith.constant dense<0.000000e+00> : vector<8x128xf32>
      %41 = vector.multi_reduction <add>, %40, %cst_20 [0] : vector<9x8x128xf32> to vector<8x128xf32>
      %42 = arith.addf %19, %41 : vector<8x128xf32>
      %43 = arith.mulf %28, %28 : vector<72x128xf32>
      %44 = vector.shape_cast %43 : vector<72x128xf32> to vector<9x8x128xf32>
      %cst_21 = arith.constant dense<0.000000e+00> : vector<8x128xf32>
      %45 = vector.multi_reduction <add>, %44, %cst_21 [0] : vector<9x8x128xf32> to vector<8x128xf32>
      %46 = arith.addf %20, %45 : vector<8x128xf32>
      %47 = arith.mulf %28, %25 : vector<72x128xf32>
      %48 = vector.shape_cast %47 : vector<72x128xf32> to vector<9x8x128xf32>
      %cst_22 = arith.constant dense<0.000000e+00> : vector<8x128xf32>
      %49 = vector.multi_reduction <add>, %48, %cst_22 [0] : vector<9x8x128xf32> to vector<8x128xf32>
      %50 = arith.addf %21, %49 : vector<8x128xf32>
      %c0_23 = arith.constant 0 : index
      %c0_24 = arith.constant 0 : index
      %c0_25 = arith.constant 0 : index
      %c0_26 = arith.constant 0 : index
      %51 = vector.load %arg7[%c0_23, %c0_24, %c0_25, %c0_26] : memref<1x6x8x128xf32, #tpu.memory_space<vmem>>, vector<1x1x8x128xf32>
      %52 = vector.shape_cast %51 : vector<1x1x8x128xf32> to vector<8x128xf32>
      %53 = arith.addf %52, %32 : vector<8x128xf32>
      %c0_27 = arith.constant 0 : index
      %c0_28 = arith.constant 0 : index
      %c0_29 = arith.constant 0 : index
      %c0_30 = arith.constant 0 : index
      %54 = vector.load %arg7[%c0_27, %c0_28, %c0_29, %c0_30] : memref<1x6x8x128xf32, #tpu.memory_space<vmem>>, vector<1x1x8x128xf32>
      %55 = vector.shape_cast %54 : vector<1x1x8x128xf32> to vector<8x128xf32>
      %56 = vector.shape_cast %53 : vector<8x128xf32> to vector<1x1x8x128xf32>
      tpu.vector_store %arg7[%c0_27, %c0_28, %c0_29, %c0_30], %56 {strides = array<i32>} : memref<1x6x8x128xf32, #tpu.memory_space<vmem>>, vector<1x1x8x128xf32>,
      %c0_31 = arith.constant 0 : index
      %c1 = arith.constant 1 : index
      %c0_32 = arith.constant 0 : index
      %c0_33 = arith.constant 0 : index
      %57 = vector.load %arg7[%c0_31, %c1, %c0_32, %c0_33] : memref<1x6x8x128xf32, #tpu.memory_space<vmem>>, vector<1x1x8x128xf32>
      %58 = vector.shape_cast %57 : vector<1x1x8x128xf32> to vector<8x128xf32>
      %59 = arith.addf %58, %36 : vector<8x128xf32>
      %c0_34 = arith.constant 0 : index
      %c1_35 = arith.constant 1 : index
      %c0_36 = arith.constant 0 : index
      %c0_37 = arith.constant 0 : index
      %60 = vector.load %arg7[%c0_34, %c1_35, %c0_36, %c0_37] : memref<1x6x8x128xf32, #tpu.memory_space<vmem>>, vector<1x1x8x128xf32>
      %61 = vector.shape_cast %60 : vector<1x1x8x128xf32> to vector<8x128xf32>
      %62 = vector.shape_cast %59 : vector<8x128xf32> to vector<1x1x8x128xf32>
      tpu.vector_store %arg7[%c0_34, %c1_35, %c0_36, %c0_37], %62 {strides = array<i32>} : memref<1x6x8x128xf32, #tpu.memory_space<vmem>>, vector<1x1x8x128xf32>,
      %c0_38 = arith.constant 0 : index
      %c2 = arith.constant 2 : index
      %c0_39 = arith.constant 0 : index
      %c0_40 = arith.constant 0 : index
      %63 = vector.load %arg7[%c0_38, %c2, %c0_39, %c0_40] : memref<1x6x8x128xf32, #tpu.memory_space<vmem>>, vector<1x1x8x128xf32>
      %64 = vector.shape_cast %63 : vector<1x1x8x128xf32> to vector<8x128xf32>
      %65 = arith.addf %64, %39 : vector<8x128xf32>
      %c0_41 = arith.constant 0 : index
      %c2_42 = arith.constant 2 : index
      %c0_43 = arith.constant 0 : index
      %c0_44 = arith.constant 0 : index
      %66 = vector.load %arg7[%c0_41, %c2_42, %c0_43, %c0_44] : memref<1x6x8x128xf32, #tpu.memory_space<vmem>>, vector<1x1x8x128xf32>
      %67 = vector.shape_cast %66 : vector<1x1x8x128xf32> to vector<8x128xf32>
      %68 = vector.shape_cast %65 : vector<8x128xf32> to vector<1x1x8x128xf32>
      tpu.vector_store %arg7[%c0_41, %c2_42, %c0_43, %c0_44], %68 {strides = array<i32>} : memref<1x6x8x128xf32, #tpu.memory_space<vmem>>, vector<1x1x8x128xf32>,
      %c0_45 = arith.constant 0 : index
      %c3 = arith.constant 3 : index
      %c0_46 = arith.constant 0 : index
      %c0_47 = arith.constant 0 : index
      %69 = vector.load %arg7[%c0_45, %c3, %c0_46, %c0_47] : memref<1x6x8x128xf32, #tpu.memory_space<vmem>>, vector<1x1x8x128xf32>
      %70 = vector.shape_cast %69 : vector<1x1x8x128xf32> to vector<8x128xf32>
      %71 = arith.addf %70, %42 : vector<8x128xf32>
      %c0_48 = arith.constant 0 : index
      %c3_49 = arith.constant 3 : index
      %c0_50 = arith.constant 0 : index
      %c0_51 = arith.constant 0 : index
      %72 = vector.load %arg7[%c0_48, %c3_49, %c0_50, %c0_51] : memref<1x6x8x128xf32, #tpu.memory_space<vmem>>, vector<1x1x8x128xf32>
      %73 = vector.shape_cast %72 : vector<1x1x8x128xf32> to vector<8x128xf32>
      %74 = vector.shape_cast %71 : vector<8x128xf32> to vector<1x1x8x128xf32>
      tpu.vector_store %arg7[%c0_48, %c3_49, %c0_50, %c0_51], %74 {strides = array<i32>} : memref<1x6x8x128xf32, #tpu.memory_space<vmem>>, vector<1x1x8x128xf32>,
      %c0_52 = arith.constant 0 : index
      %c4 = arith.constant 4 : index
      %c0_53 = arith.constant 0 : index
      %c0_54 = arith.constant 0 : index
      %75 = vector.load %arg7[%c0_52, %c4, %c0_53, %c0_54] : memref<1x6x8x128xf32, #tpu.memory_space<vmem>>, vector<1x1x8x128xf32>
      %76 = vector.shape_cast %75 : vector<1x1x8x128xf32> to vector<8x128xf32>
      %77 = arith.addf %76, %46 : vector<8x128xf32>
      %c0_55 = arith.constant 0 : index
      %c4_56 = arith.constant 4 : index
      %c0_57 = arith.constant 0 : index
      %c0_58 = arith.constant 0 : index
      %78 = vector.load %arg7[%c0_55, %c4_56, %c0_57, %c0_58] : memref<1x6x8x128xf32, #tpu.memory_space<vmem>>, vector<1x1x8x128xf32>
      %79 = vector.shape_cast %78 : vector<1x1x8x128xf32> to vector<8x128xf32>
      %80 = vector.shape_cast %77 : vector<8x128xf32> to vector<1x1x8x128xf32>
      tpu.vector_store %arg7[%c0_55, %c4_56, %c0_57, %c0_58], %80 {strides = array<i32>} : memref<1x6x8x128xf32, #tpu.memory_space<vmem>>, vector<1x1x8x128xf32>,
      %c0_59 = arith.constant 0 : index
      %c5 = arith.constant 5 : index
      %c0_60 = arith.constant 0 : index
      %c0_61 = arith.constant 0 : index
      %81 = vector.load %arg7[%c0_59, %c5, %c0_60, %c0_61] : memref<1x6x8x128xf32, #tpu.memory_space<vmem>>, vector<1x1x8x128xf32>
      %82 = vector.shape_cast %81 : vector<1x1x8x128xf32> to vector<8x128xf32>
      %83 = arith.addf %82, %50 : vector<8x128xf32>
      %c0_62 = arith.constant 0 : index
      %c5_63 = arith.constant 5 : index
      %c0_64 = arith.constant 0 : index
      %c0_65 = arith.constant 0 : index
      %84 = vector.load %arg7[%c0_62, %c5_63, %c0_64, %c0_65] : memref<1x6x8x128xf32, #tpu.memory_space<vmem>>, vector<1x1x8x128xf32>
      %85 = vector.shape_cast %84 : vector<1x1x8x128xf32> to vector<8x128xf32>
      %86 = vector.shape_cast %83 : vector<8x128xf32> to vector<1x1x8x128xf32>
      tpu.vector_store %arg7[%c0_62, %c5_63, %c0_64, %c0_65], %86 {strides = array<i32>} : memref<1x6x8x128xf32, #tpu.memory_space<vmem>>, vector<1x1x8x128xf32>,
    } else {
    }
    %c72_i32_4 = arith.constant 72 : i32
    %12 = arith.addi %7, %c72_i32_4 : i32
    %13 = arith.cmpi sgt, %12, %4 : i32
    %14 = arith.extui %13 : i1 to i32
    %c0_i32_5 = arith.constant 0 : i32
    %15 = arith.cmpi ne, %14, %c0_i32_5 : i32
    scf.if %15 {
      %cst = arith.constant 0.000000e+00 : f32
      %16 = vector.broadcast %cst : f32 to vector<8x128xf32>
      %cst_6 = arith.constant 0.000000e+00 : f32
      %17 = vector.broadcast %cst_6 : f32 to vector<8x128xf32>
      %cst_7 = arith.constant 0.000000e+00 : f32
      %18 = vector.broadcast %cst_7 : f32 to vector<8x128xf32>
      %cst_8 = arith.constant 0.000000e+00 : f32
      %19 = vector.broadcast %cst_8 : f32 to vector<8x128xf32>
      %cst_9 = arith.constant 0.000000e+00 : f32
      %20 = vector.broadcast %cst_9 : f32 to vector<8x128xf32>
      %cst_10 = arith.constant 0.000000e+00 : f32
      %21 = vector.broadcast %cst_10 : f32 to vector<8x128xf32>
      %c0_11 = arith.constant 0 : index
      %c0_12 = arith.constant 0 : index
      %22 = vector.load %arg4[%c0_11, %c0_12] : memref<72x128xf32, #tpu.memory_space<vmem>>, vector<72x128xf32>
      %c0_13 = arith.constant 0 : index
      %c0_14 = arith.constant 0 : index
      %23 = vector.load %arg5[%c0_13, %c0_14] : memref<72x128xf32, #tpu.memory_space<vmem>>, vector<72x128xf32>
      %c0_15 = arith.constant 0 : index
      %c0_16 = arith.constant 0 : index
      %24 = vector.load %arg6[%c0_15, %c0_16] : memref<72x128xf32, #tpu.memory_space<vmem>>, vector<72x128xf32>
      %25 = arith.subf %22, %23 : vector<72x128xf32>
      %26 = vector.broadcast %3 : f32 to vector<72x128xf32>
      %27 = arith.mulf %22, %26 : vector<72x128xf32>
      %28 = arith.subf %27, %24 : vector<72x128xf32>
      %c0_i32_17 = arith.constant 0 : i32
      %29 = arith.addi %7, %c0_i32_17 : i32
      %30 = tpu.iota {dimensions = array<i32: 0>} : vector<72x128xi32>
      %31 = vector.broadcast %29 : i32 to vector<72x128xi32>
      %32 = arith.addi %31, %30 : vector<72x128xi32>
      %33 = vector.broadcast %4 : i32 to vector<72x128xi32>
      %34 = arith.cmpi slt, %32, %33 : vector<72x128xi32>
      %cst_18 = arith.constant 0.000000e+00 : f32
      %35 = vector.broadcast %cst_18 : f32 to vector<72x128xf32>
      %36 = arith.select %34, %25, %35 : vector<72x128xi1>, vector<72x128xf32>
      %cst_19 = arith.constant 0.000000e+00 : f32
      %37 = vector.broadcast %cst_19 : f32 to vector<72x128xf32>
      %38 = arith.select %34, %28, %37 : vector<72x128xi1>, vector<72x128xf32>
      %39 = arith.mulf %36, %36 : vector<72x128xf32>
      %40 = vector.shape_cast %39 : vector<72x128xf32> to vector<9x8x128xf32>
      %cst_20 = arith.constant dense<0.000000e+00> : vector<8x128xf32>
      %41 = vector.multi_reduction <add>, %40, %cst_20 [0] : vector<9x8x128xf32> to vector<8x128xf32>
      %42 = arith.addf %16, %41 : vector<8x128xf32>
      %43 = math.absf %36 : vector<72x128xf32>
      %44 = vector.shape_cast %43 : vector<72x128xf32> to vector<9x8x128xf32>
      %cst_21 = arith.constant dense<0.000000e+00> : vector<8x128xf32>
      %45 = vector.multi_reduction <add>, %44, %cst_21 [0] : vector<9x8x128xf32> to vector<8x128xf32>
      %46 = arith.addf %17, %45 : vector<8x128xf32>
      %47 = vector.shape_cast %36 : vector<72x128xf32> to vector<9x8x128xf32>
      %cst_22 = arith.constant dense<0.000000e+00> : vector<8x128xf32>
      %48 = vector.multi_reduction <add>, %47, %cst_22 [0] : vector<9x8x128xf32> to vector<8x128xf32>
      %49 = arith.addf %18, %48 : vector<8x128xf32>
      %50 = vector.shape_cast %38 : vector<72x128xf32> to vector<9x8x128xf32>
      %cst_23 = arith.constant dense<0.000000e+00> : vector<8x128xf32>
      %51 = vector.multi_reduction <add>, %50, %cst_23 [0] : vector<9x8x128xf32> to vector<8x128xf32>
      %52 = arith.addf %19, %51 : vector<8x128xf32>
      %53 = arith.mulf %38, %38 : vector<72x128xf32>
      %54 = vector.shape_cast %53 : vector<72x128xf32> to vector<9x8x128xf32>
      %cst_24 = arith.constant dense<0.000000e+00> : vector<8x128xf32>
      %55 = vector.multi_reduction <add>, %54, %cst_24 [0] : vector<9x8x128xf32> to vector<8x128xf32>
      %56 = arith.addf %20, %55 : vector<8x128xf32>
      %57 = arith.mulf %38, %36 : vector<72x128xf32>
      %58 = vector.shape_cast %57 : vector<72x128xf32> to vector<9x8x128xf32>
      %cst_25 = arith.constant dense<0.000000e+00> : vector<8x128xf32>
      %59 = vector.multi_reduction <add>, %58, %cst_25 [0] : vector<9x8x128xf32> to vector<8x128xf32>
      %60 = arith.addf %21, %59 : vector<8x128xf32>
      %c0_26 = arith.constant 0 : index
      %c0_27 = arith.constant 0 : index
      %c0_28 = arith.constant 0 : index
      %c0_29 = arith.constant 0 : index
      %61 = vector.load %arg7[%c0_26, %c0_27, %c0_28, %c0_29] : memref<1x6x8x128xf32, #tpu.memory_space<vmem>>, vector<1x1x8x128xf32>
      %62 = vector.shape_cast %61 : vector<1x1x8x128xf32> to vector<8x128xf32>
      %63 = arith.addf %62, %42 : vector<8x128xf32>
      %c0_30 = arith.constant 0 : index
      %c0_31 = arith.constant 0 : index
      %c0_32 = arith.constant 0 : index
      %c0_33 = arith.constant 0 : index
      %64 = vector.load %arg7[%c0_30, %c0_31, %c0_32, %c0_33] : memref<1x6x8x128xf32, #tpu.memory_space<vmem>>, vector<1x1x8x128xf32>
      %65 = vector.shape_cast %64 : vector<1x1x8x128xf32> to vector<8x128xf32>
      %66 = vector.shape_cast %63 : vector<8x128xf32> to vector<1x1x8x128xf32>
      tpu.vector_store %arg7[%c0_30, %c0_31, %c0_32, %c0_33], %66 {strides = array<i32>} : memref<1x6x8x128xf32, #tpu.memory_space<vmem>>, vector<1x1x8x128xf32>,
      %c0_34 = arith.constant 0 : index
      %c1 = arith.constant 1 : index
      %c0_35 = arith.constant 0 : index
      %c0_36 = arith.constant 0 : index
      %67 = vector.load %arg7[%c0_34, %c1, %c0_35, %c0_36] : memref<1x6x8x128xf32, #tpu.memory_space<vmem>>, vector<1x1x8x128xf32>
      %68 = vector.shape_cast %67 : vector<1x1x8x128xf32> to vector<8x128xf32>
      %69 = arith.addf %68, %46 : vector<8x128xf32>
      %c0_37 = arith.constant 0 : index
      %c1_38 = arith.constant 1 : index
      %c0_39 = arith.constant 0 : index
      %c0_40 = arith.constant 0 : index
      %70 = vector.load %arg7[%c0_37, %c1_38, %c0_39, %c0_40] : memref<1x6x8x128xf32, #tpu.memory_space<vmem>>, vector<1x1x8x128xf32>
      %71 = vector.shape_cast %70 : vector<1x1x8x128xf32> to vector<8x128xf32>
      %72 = vector.shape_cast %69 : vector<8x128xf32> to vector<1x1x8x128xf32>
      tpu.vector_store %arg7[%c0_37, %c1_38, %c0_39, %c0_40], %72 {strides = array<i32>} : memref<1x6x8x128xf32, #tpu.memory_space<vmem>>, vector<1x1x8x128xf32>,
      %c0_41 = arith.constant 0 : index
      %c2 = arith.constant 2 : index
      %c0_42 = arith.constant 0 : index
      %c0_43 = arith.constant 0 : index
      %73 = vector.load %arg7[%c0_41, %c2, %c0_42, %c0_43] : memref<1x6x8x128xf32, #tpu.memory_space<vmem>>, vector<1x1x8x128xf32>
      %74 = vector.shape_cast %73 : vector<1x1x8x128xf32> to vector<8x128xf32>
      %75 = arith.addf %74, %49 : vector<8x128xf32>
      %c0_44 = arith.constant 0 : index
      %c2_45 = arith.constant 2 : index
      %c0_46 = arith.constant 0 : index
      %c0_47 = arith.constant 0 : index
      %76 = vector.load %arg7[%c0_44, %c2_45, %c0_46, %c0_47] : memref<1x6x8x128xf32, #tpu.memory_space<vmem>>, vector<1x1x8x128xf32>
      %77 = vector.shape_cast %76 : vector<1x1x8x128xf32> to vector<8x128xf32>
      %78 = vector.shape_cast %75 : vector<8x128xf32> to vector<1x1x8x128xf32>
      tpu.vector_store %arg7[%c0_44, %c2_45, %c0_46, %c0_47], %78 {strides = array<i32>} : memref<1x6x8x128xf32, #tpu.memory_space<vmem>>, vector<1x1x8x128xf32>,
      %c0_48 = arith.constant 0 : index
      %c3 = arith.constant 3 : index
      %c0_49 = arith.constant 0 : index
      %c0_50 = arith.constant 0 : index
      %79 = vector.load %arg7[%c0_48, %c3, %c0_49, %c0_50] : memref<1x6x8x128xf32, #tpu.memory_space<vmem>>, vector<1x1x8x128xf32>
      %80 = vector.shape_cast %79 : vector<1x1x8x128xf32> to vector<8x128xf32>
      %81 = arith.addf %80, %52 : vector<8x128xf32>
      %c0_51 = arith.constant 0 : index
      %c3_52 = arith.constant 3 : index
      %c0_53 = arith.constant 0 : index
      %c0_54 = arith.constant 0 : index
      %82 = vector.load %arg7[%c0_51, %c3_52, %c0_53, %c0_54] : memref<1x6x8x128xf32, #tpu.memory_space<vmem>>, vector<1x1x8x128xf32>
      %83 = vector.shape_cast %82 : vector<1x1x8x128xf32> to vector<8x128xf32>
      %84 = vector.shape_cast %81 : vector<8x128xf32> to vector<1x1x8x128xf32>
      tpu.vector_store %arg7[%c0_51, %c3_52, %c0_53, %c0_54], %84 {strides = array<i32>} : memref<1x6x8x128xf32, #tpu.memory_space<vmem>>, vector<1x1x8x128xf32>,
      %c0_55 = arith.constant 0 : index
      %c4 = arith.constant 4 : index
      %c0_56 = arith.constant 0 : index
      %c0_57 = arith.constant 0 : index
      %85 = vector.load %arg7[%c0_55, %c4, %c0_56, %c0_57] : memref<1x6x8x128xf32, #tpu.memory_space<vmem>>, vector<1x1x8x128xf32>
      %86 = vector.shape_cast %85 : vector<1x1x8x128xf32> to vector<8x128xf32>
      %87 = arith.addf %86, %56 : vector<8x128xf32>
      %c0_58 = arith.constant 0 : index
      %c4_59 = arith.constant 4 : index
      %c0_60 = arith.constant 0 : index
      %c0_61 = arith.constant 0 : index
      %88 = vector.load %arg7[%c0_58, %c4_59, %c0_60, %c0_61] : memref<1x6x8x128xf32, #tpu.memory_space<vmem>>, vector<1x1x8x128xf32>
      %89 = vector.shape_cast %88 : vector<1x1x8x128xf32> to vector<8x128xf32>
      %90 = vector.shape_cast %87 : vector<8x128xf32> to vector<1x1x8x128xf32>
      tpu.vector_store %arg7[%c0_58, %c4_59, %c0_60, %c0_61], %90 {strides = array<i32>} : memref<1x6x8x128xf32, #tpu.memory_space<vmem>>, vector<1x1x8x128xf32>,
      %c0_62 = arith.constant 0 : index
      %c5 = arith.constant 5 : index
      %c0_63 = arith.constant 0 : index
      %c0_64 = arith.constant 0 : index
      %91 = vector.load %arg7[%c0_62, %c5, %c0_63, %c0_64] : memref<1x6x8x128xf32, #tpu.memory_space<vmem>>, vector<1x1x8x128xf32>
      %92 = vector.shape_cast %91 : vector<1x1x8x128xf32> to vector<8x128xf32>
      %93 = arith.addf %92, %60 : vector<8x128xf32>
      %c0_65 = arith.constant 0 : index
      %c5_66 = arith.constant 5 : index
      %c0_67 = arith.constant 0 : index
      %c0_68 = arith.constant 0 : index
      %94 = vector.load %arg7[%c0_65, %c5_66, %c0_67, %c0_68] : memref<1x6x8x128xf32, #tpu.memory_space<vmem>>, vector<1x1x8x128xf32>
      %95 = vector.shape_cast %94 : vector<1x1x8x128xf32> to vector<8x128xf32>
      %96 = vector.shape_cast %93 : vector<8x128xf32> to vector<1x1x8x128xf32>
      tpu.vector_store %arg7[%c0_65, %c5_66, %c0_67, %c0_68], %96 {strides = array<i32>} : memref<1x6x8x128xf32, #tpu.memory_space<vmem>>, vector<1x1x8x128xf32>,
    } else {
    }
    return
  }
  func.func @transform_0(%arg0: i32, %arg1: i32) -> i32 {
    %c0_i32 = arith.constant 0 : i32
    %c0_i32_0 = arith.constant 0 : i32
    return %c0_i32 : i32
  }
  func.func @transform_1(%arg0: i32, %arg1: i32) -> i32 {
    %c0_i32 = arith.constant 0 : i32
    %c0_i32_0 = arith.constant 0 : i32
    return %c0_i32 : i32
  }
  func.func @transform_2(%arg0: i32, %arg1: i32) -> (i32, i32) {
    %c0_i32 = arith.constant 0 : i32
    %c0_i32_0 = arith.constant 0 : i32
    return %arg1, %c0_i32 : i32, i32
  }
  func.func @transform_3(%arg0: i32, %arg1: i32) -> (i32, i32) {
    %c0_i32 = arith.constant 0 : i32
    %c0_i32_0 = arith.constant 0 : i32
    return %arg1, %c0_i32 : i32, i32
  }
  func.func @transform_4(%arg0: i32, %arg1: i32) -> (i32, i32) {
    %c0_i32 = arith.constant 0 : i32
    %c0_i32_0 = arith.constant 0 : i32
    return %arg1, %c0_i32 : i32, i32
  }
  func.func @transform_5(%arg0: i32, %arg1: i32) -> (i32, i32, i32, i32) {
    %c0_i32 = arith.constant 0 : i32
    %c0_i32_0 = arith.constant 0 : i32
    %c0_i32_1 = arith.constant 0 : i32
    %c0_i32_2 = arith.constant 0 : i32
    return %arg0, %c0_i32, %c0_i32_0, %c0_i32_1 : i32, i32, i32, i32
  }
}

</mosaic_0001>

<llo_original>
// kernel: tpu_custom_call.1
$region0: #{tpu_custom_call.1}
  #allocation0 [shape = 'u32[]', space=smem, size = 0x4, offset = 0x4, fixed_abs, tag = 'smem constant byte address 0x4 - core index']
  #allocation1 [shape = 'u32[144,128]{1,0:T(1,128)}', space=vmem, size = 0x12000, scoped, tag = 'internal scratch']
  #allocation2 [shape = 's32[1]{0:T(128)S(6)}', space=smem, size = 0x200, scoped, tag = 'scoped memory for tpu_custom_call.1']
  #allocation3 [shape = 'f32[1]{0:T(128)S(6)}', space=smem, size = 0x200, scoped, tag = 'scoped memory for tpu_custom_call.1']
  %s0 = inlined_call_operand.<no memory space> [shape: s32[1], index: 0, kind: input, shape index: {}]
  %s1 = inlined_call_operand.<no memory space> [shape: f32[1], index: 1, kind: input, shape index: {}]
  %s2 = inlined_call_operand.hbm [shape: f32[67,128], index: 2, kind: input, shape index: {}]
  %s3 = inlined_call_operand.hbm [shape: f32[67,128], index: 3, kind: input, shape index: {}]
  %s4 = inlined_call_operand.hbm [shape: f32[67,128], index: 4, kind: input, shape index: {}]
  %s5 = inlined_call_operand.hbm [shape: f32[1,6,8,128], index: 5, kind: output, shape index: {}]
  %s6 = sld [smem:[#allocation0]]
  $region54: #{tpu_custom_call.1} parent=0
    _
  %s8 = ssub.s32 1, %s6
  %s9 = scalar_select 0, %s8, %s6
  %10 = sst [smem:[#allocation2]] %s0
  %11 = sst [smem:[#allocation3]] %s1
  $region1: #{tpu_custom_call.1} parent=0
    #allocation4 [shape = 'u8[36864]{0}', space=vmem, size = 0x9000, scoped, tag = 'input window, operand 2, single buffered']
    #allocation5 [shape = 's32[1]{0}', space=sflag, size = 0x4, scoped, tag = 'scoped memory for tpu_custom_call.1']
    #allocation6 [shape = 's32[1]{0}', space=sflag, size = 0x4, scoped, tag = 'scoped memory for tpu_custom_call.1']
    #allocation7 [shape = 'u8[36864]{0}', space=vmem, size = 0x9000, scoped, tag = 'input window, operand 3, single buffered']
    #allocation8 [shape = 's32[1]{0}', space=sflag, size = 0x4, scoped, tag = 'scoped memory for tpu_custom_call.1']
    #allocation9 [shape = 'u8[36864]{0}', space=vmem, size = 0x9000, scoped, tag = 'input window, operand 4, single buffered']
    #allocation10 [shape = 'u8[24576]{0}', space=vmem, size = 0x6000, scoped, tag = 'output window, operand 0, single buffered']
    %12 = vsyncpa [#allocation5], 0
    %13 = vsyncpa [#allocation8], 0
    %14 = vsyncpa [#allocation6], 0
    // Predicated region
    $region2: #{tpu_custom_call.1} parent=1 // pred_check
      _
    $region3: #{tpu_custom_call.1} parent=1 // pred_check_branch
      %16 = sbr.rel (0) target = $region5
    $region4: #{tpu_custom_call.1} parent=1 // pred_region
      _
    $region5: #{tpu_custom_call.1} parent=1 // pred_fallthru
      _
    // Predicated region
    $region6: #{tpu_custom_call.1} parent=1 // pred_check
      _
    $region7: #{tpu_custom_call.1} parent=1 // pred_check_branch
      %18 = sbr.rel (0) target = $region9
    $region8: #{tpu_custom_call.1} parent=1 // pred_region
      _
    $region9: #{tpu_custom_call.1} parent=1 // pred_fallthru
      _
    // Predicated region
    $region10: #{tpu_custom_call.1} parent=1 // pred_check
      _
    $region11: #{tpu_custom_call.1} parent=1 // pred_check_branch
      %20 = sbr.rel (0) target = $region13
    $region12: #{tpu_custom_call.1} parent=1 // pred_region
      %s22 = ssub.s32 1152, 1152
      %23 = vsyncadd [#allocation5], %s22
      %s24 = sshll.u32 [#allocation4], 4
      %s25 = int_to_ptr.vmem [resolvable:$true] %s24
      %30 = dma.hbm_to_vmem [thread:$0]  %s2, 1152, %s25, [#allocation5], 128, 128, 8
    $region13: #{tpu_custom_call.1} parent=1 // pred_fallthru
      _
    // Predicated region
    $region14: #{tpu_custom_call.1} parent=1 // pred_check
      _
    $region15: #{tpu_custom_call.1} parent=1 // pred_check_branch
      %32 = sbr.rel (0) target = $region17
    $region16: #{tpu_custom_call.1} parent=1 // pred_region
      %s34 = ssub.s32 1152, 1152
      %35 = vsyncadd [#allocation8], %s34
      %s36 = sshll.u32 [#allocation7], 4
      %s37 = int_to_ptr.vmem [resolvable:$true] %s36
      %42 = dma.hbm_to_vmem [thread:$0]  %s3, 1152, %s37, [#allocation8], 128, 128, 8
    $region17: #{tpu_custom_call.1} parent=1 // pred_fallthru
      _
    // Predicated region
    $region18: #{tpu_custom_call.1} parent=1 // pred_check
      _
    $region19: #{tpu_custom_call.1} parent=1 // pred_check_branch
      %44 = sbr.rel (0) target = $region21
    $region20: #{tpu_custom_call.1} parent=1 // pred_region
      %s46 = ssub.s32 1152, 1152
      %47 = vsyncadd [#allocation8], %s46
      %s48 = sshll.u32 [#allocation9], 4
      %s49 = int_to_ptr.vmem [resolvable:$true] %s48
      %54 = dma.hbm_to_vmem [thread:$0]  %s4, 1152, %s49, [#allocation8], 128, 128, 8
    $region21: #{tpu_custom_call.1} parent=1 // pred_fallthru
      _
    // Predicated region
    $region22: #{tpu_custom_call.1} parent=1 // pred_check
      _
    $region23: #{tpu_custom_call.1} parent=1 // pred_check_branch
      %56 = sbr.rel (0) target = $region25
    $region24: #{tpu_custom_call.1} parent=1 // pred_region
      %57 = dma.done [#allocation5], 1152
    $region25: #{tpu_custom_call.1} parent=1 // pred_fallthru
      _
    // Predicated region
    $region26: #{tpu_custom_call.1} parent=1 // pred_check
      _
    $region27: #{tpu_custom_call.1} parent=1 // pred_check_branch
      %59 = sbr.rel (0) target = $region29
    $region28: #{tpu_custom_call.1} parent=1 // pred_region
      %60 = dma.done [#allocation8], 1152
    $region29: #{tpu_custom_call.1} parent=1 // pred_fallthru
      _
    // Predicated region
    $region30: #{tpu_custom_call.1} parent=1 // pred_check
      _
    $region31: #{tpu_custom_call.1} parent=1 // pred_check_branch
      %62 = sbr.rel (0) target = $region33
    $region32: #{tpu_custom_call.1} parent=1 // pred_region
      %63 = dma.done [#allocation8], 1152
    $region33: #{tpu_custom_call.1} parent=1 // pred_fallthru
      _
    %p64 = scmp.eq.s32.totalorder 0, 0
    // Predicated region
    $region34: #{tpu_custom_call.1} parent=1 // pred_check
      %p65 = pneg %p64
    $region35: #{tpu_custom_call.1} parent=1 // pred_check_branch
      %67 = sbr.rel (%p65) target = $region37
    $region36: #{tpu_custom_call.1} parent=1 // pred_region
      %68 = vst [vmem:[#allocation10] sm:$0xff] 0.0
      %69 = vst [vmem:[#allocation10 + $0x8] sm:$0xff] 0.0
      %70 = vst [vmem:[#allocation10 + $0x10] sm:$0xff] 0.0
      %71 = vst [vmem:[#allocation10 + $0x18] sm:$0xff] 0.0
      %72 = vst [vmem:[#allocation10 + $0x20] sm:$0xff] 0.0
      %73 = vst [vmem:[#allocation10 + $0x28] sm:$0xff] 0.0
    $region37: #{tpu_custom_call.1} parent=1 // pred_fallthru
      _
    %s74 = sld [smem:[#allocation3]]
    %s75 = sld [smem:[#allocation2]]
    %s76 = sadd.s32 0, 0
    %s77 = smul.u32 %s76, 72
    %s78 = sadd.s32 %s77, 72
    %p79 = scmp.le.s32.totalorder %s78, %s75
    // Predicated region
    $region38: #{tpu_custom_call.1} parent=1 // pred_check
      %p80 = pneg %p79
    $region39: #{tpu_custom_call.1} parent=1 // pred_check_branch
      %82 = sbr.rel (%p80) target = $region41
    $region40: #{tpu_custom_call.1} parent=1 // pred_region
      %v83 = vld [vmem:[#allocation4] sm:$0xff]
      %v84 = vld [vmem:[#allocation4 + $0x8] sm:$0xff]
      %v85 = vld [vmem:[#allocation4 + $0x10] sm:$0xff]
      %v86 = vld [vmem:[#allocation4 + $0x18] sm:$0xff]
      %v87 = vld [vmem:[#allocation4 + $0x20] sm:$0xff]
      %v88 = vld [vmem:[#allocation4 + $0x28] sm:$0xff]
      %v89 = vld [vmem:[#allocation4 + $0x30] sm:$0xff]
      %v90 = vld [vmem:[#allocation4 + $0x38] sm:$0xff]
      %v91 = vld [vmem:[#allocation4 + $0x40] sm:$0xff]
      %v92 = vld [vmem:[#allocation7] sm:$0xff]
      %v93 = vld [vmem:[#allocation7 + $0x8] sm:$0xff]
      %v94 = vld [vmem:[#allocation7 + $0x10] sm:$0xff]
      %v95 = vld [vmem:[#allocation7 + $0x18] sm:$0xff]
      %v96 = vld [vmem:[#allocation7 + $0x20] sm:$0xff]
      %v97 = vld [vmem:[#allocation7 + $0x28] sm:$0xff]
      %v98 = vld [vmem:[#allocation7 + $0x30] sm:$0xff]
      %v99 = vld [vmem:[#allocation7 + $0x38] sm:$0xff]
      %v100 = vld [vmem:[#allocation7 + $0x40] sm:$0xff]
      %v101 = vld [vmem:[#allocation9] sm:$0xff]
      %v102 = vld [vmem:[#allocation9 + $0x8] sm:$0xff]
      %v103 = vld [vmem:[#allocation9 + $0x10] sm:$0xff]
      %v104 = vld [vmem:[#allocation9 + $0x18] sm:$0xff]
      %v105 = vld [vmem:[#allocation9 + $0x20] sm:$0xff]
      %v106 = vld [vmem:[#allocation9 + $0x28] sm:$0xff]
      %v107 = vld [vmem:[#allocation9 + $0x30] sm:$0xff]
      %v108 = vld [vmem:[#allocation9 + $0x38] sm:$0xff]
      %v109 = vld [vmem:[#allocation9 + $0x40] sm:$0xff]
      %v110 = vsub.f32 %v83, %v92
      %v111 = vsub.f32 %v84, %v93
      %v112 = vsub.f32 %v85, %v94
      %v113 = vsub.f32 %v86, %v95
      %v114 = vsub.f32 %v87, %v96
      %v115 = vsub.f32 %v88, %v97
      %v116 = vsub.f32 %v89, %v98
      %v117 = vsub.f32 %v90, %v99
      %v118 = vsub.f32 %v91, %v100
      %v119 = vstv %s74
      %v120 = vmul.f32 %v83, %v119
      %v121 = vmul.f32 %v84, %v119
      %v122 = vmul.f32 %v85, %v119
      %v123 = vmul.f32 %v86, %v119
      %v124 = vmul.f32 %v87, %v119
      %v125 = vmul.f32 %v88, %v119
      %v126 = vmul.f32 %v89, %v119
      %v127 = vmul.f32 %v90, %v119
      %v128 = vmul.f32 %v91, %v119
      %v129 = vsub.f32 %v120, %v101
      %v130 = vsub.f32 %v121, %v102
      %v131 = vsub.f32 %v122, %v103
      %v132 = vsub.f32 %v123, %v104
      %v133 = vsub.f32 %v124, %v105
      %v134 = vsub.f32 %v125, %v106
      %v135 = vsub.f32 %v126, %v107
      %v136 = vsub.f32 %v127, %v108
      %v137 = vsub.f32 %v128, %v109
      %v138 = vmul.f32 %v110, %v110
      %v139 = vmul.f32 %v111, %v111
      %v140 = vmul.f32 %v112, %v112
      %v141 = vmul.f32 %v113, %v113
      %v142 = vmul.f32 %v114, %v114
      %v143 = vmul.f32 %v115, %v115
      %v144 = vmul.f32 %v116, %v116
      %v145 = vmul.f32 %v117, %v117
      %v146 = vmul.f32 %v118, %v118
      %v147 = vadd.f32 %v138, %v139
      %v148 = vadd.f32 %v147, %v140
      %v149 = vadd.f32 %v148, %v141
      %v150 = vadd.f32 %v149, %v142
      %v151 = vadd.f32 %v150, %v143
      %v152 = vadd.f32 %v151, %v144
      %v153 = vadd.f32 %v152, %v145
      %v154 = vadd.f32 %v153, %v146
      %v155 = vadd.f32 %v154, 0.0
      %v156 = vand.u32 2147483647, %v110
      %v157 = vand.u32 2147483647, %v111
      %v158 = vand.u32 2147483647, %v112
      %v159 = vand.u32 2147483647, %v113
      %v160 = vand.u32 2147483647, %v114
      %v161 = vand.u32 2147483647, %v115
      %v162 = vand.u32 2147483647, %v116
      %v163 = vand.u32 2147483647, %v117
      %v164 = vand.u32 2147483647, %v118
      %v165 = vadd.f32 %v156, %v157
      %v166 = vadd.f32 %v165, %v158
      %v167 = vadd.f32 %v166, %v159
      %v168 = vadd.f32 %v167, %v160
      %v169 = vadd.f32 %v168, %v161
      %v170 = vadd.f32 %v169, %v162
      %v171 = vadd.f32 %v170, %v163
      %v172 = vadd.f32 %v171, %v164
      %v173 = vadd.f32 %v172, 0.0
      %v174 = vadd.f32 %v110, %v111
      %v175 = vadd.f32 %v174, %v112
      %v176 = vadd.f32 %v175, %v113
      %v177 = vadd.f32 %v176, %v114
      %v178 = vadd.f32 %v177, %v115
      %v179 = vadd.f32 %v178, %v116
      %v180 = vadd.f32 %v179, %v117
      %v181 = vadd.f32 %v180, %v118
      %v182 = vadd.f32 %v181, 0.0
      %v183 = vadd.f32 %v129, %v130
      %v184 = vadd.f32 %v183, %v131
      %v185 = vadd.f32 %v184, %v132
      %v186 = vadd.f32 %v185, %v133
      %v187 = vadd.f32 %v186, %v134
      %v188 = vadd.f32 %v187, %v135
      %v189 = vadd.f32 %v188, %v136
      %v190 = vadd.f32 %v189, %v137
      %v191 = vadd.f32 %v190, 0.0
      %v192 = vmul.f32 %v129, %v129
      %v193 = vmul.f32 %v130, %v130
      %v194 = vmul.f32 %v131, %v131
      %v195 = vmul.f32 %v132, %v132
      %v196 = vmul.f32 %v133, %v133
      %v197 = vmul.f32 %v134, %v134
      %v198 = vmul.f32 %v135, %v135
      %v199 = vmul.f32 %v136, %v136
      %v200 = vmul.f32 %v137, %v137
      %v201 = vadd.f32 %v192, %v193
      %v202 = vadd.f32 %v201, %v194
      %v203 = vadd.f32 %v202, %v195
      %v204 = vadd.f32 %v203, %v196
      %v205 = vadd.f32 %v204, %v197
      %v206 = vadd.f32 %v205, %v198
      %v207 = vadd.f32 %v206, %v199
      %v208 = vadd.f32 %v207, %v200
      %v209 = vadd.f32 %v208, 0.0
      %v210 = vmul.f32 %v129, %v110
      %v211 = vmul.f32 %v130, %v111
      %v212 = vmul.f32 %v131, %v112
      %v213 = vmul.f32 %v132, %v113
      %v214 = vmul.f32 %v133, %v114
      %v215 = vmul.f32 %v134, %v115
      %v216 = vmul.f32 %v135, %v116
      %v217 = vmul.f32 %v136, %v117
      %v218 = vmul.f32 %v137, %v118
      %v219 = vadd.f32 %v210, %v211
      %v220 = vadd.f32 %v219, %v212
      %v221 = vadd.f32 %v220, %v213
      %v222 = vadd.f32 %v221, %v214
      %v223 = vadd.f32 %v222, %v215
      %v224 = vadd.f32 %v223, %v216
      %v225 = vadd.f32 %v224, %v217
      %v226 = vadd.f32 %v225, %v218
      %v227 = vadd.f32 %v226, 0.0
      %v228 = vld [vmem:[#allocation10] sm:$0xff]
      %v229 = vadd.f32 %v228, %v155
      %230 = vst [vmem:[#allocation10] sm:$0xff] %v229
      %s231 = scalar_lea.vmem [#allocation10], 8
      %v232 = vld [vmem:[%s231] sm:$0xff]
      %v233 = vadd.f32 %v232, %v173
      %234 = vst [vmem:[%s231] sm:$0xff] %v233
      %s235 = scalar_lea.vmem [#allocation10], 16
      %v236 = vld [vmem:[%s235] sm:$0xff]
      %v237 = vadd.f32 %v236, %v182
      %238 = vst [vmem:[%s235] sm:$0xff] %v237
      %s239 = scalar_lea.vmem [#allocation10], 24
      %v240 = vld [vmem:[%s239] sm:$0xff]
      %v241 = vadd.f32 %v240, %v191
      %242 = vst [vmem:[%s239] sm:$0xff] %v241
      %s243 = scalar_lea.vmem [#allocation10], 32
      %v244 = vld [vmem:[%s243] sm:$0xff]
      %v245 = vadd.f32 %v244, %v209
      %246 = vst [vmem:[%s243] sm:$0xff] %v245
      %s247 = scalar_lea.vmem [#allocation10], 40
      %v248 = vld [vmem:[%s247] sm:$0xff]
      %v249 = vadd.f32 %v248, %v227
      %250 = vst [vmem:[%s247] sm:$0xff] %v249
    $region41: #{tpu_custom_call.1} parent=1 // pred_fallthru
      _
    %p251 = scmp.gt.s32.totalorder %s78, %s75
    // Predicated region
    $region42: #{tpu_custom_call.1} parent=1 // pred_check
      %p252 = pneg %p251
    $region43: #{tpu_custom_call.1} parent=1 // pred_check_branch
      %254 = sbr.rel (%p252) target = $region45
    $region44: #{tpu_custom_call.1} parent=1 // pred_region
      %v255 = vld [vmem:[#allocation4] sm:$0xff]
      %v256 = vld [vmem:[#allocation4 + $0x8] sm:$0xff]
      %v257 = vld [vmem:[#allocation4 + $0x10] sm:$0xff]
      %v258 = vld [vmem:[#allocation4 + $0x18] sm:$0xff]
      %v259 = vld [vmem:[#allocation4 + $0x20] sm:$0xff]
      %v260 = vld [vmem:[#allocation4 + $0x28] sm:$0xff]
      %v261 = vld [vmem:[#allocation4 + $0x30] sm:$0xff]
      %v262 = vld [vmem:[#allocation4 + $0x38] sm:$0xff]
      %v263 = vld [vmem:[#allocation4 + $0x40] sm:$0xff]
      %v264 = vld [vmem:[#allocation7] sm:$0xff]
      %v265 = vld [vmem:[#allocation7 + $0x8] sm:$0xff]
      %v266 = vld [vmem:[#allocation7 + $0x10] sm:$0xff]
      %v267 = vld [vmem:[#allocation7 + $0x18] sm:$0xff]
      %v268 = vld [vmem:[#allocation7 + $0x20] sm:$0xff]
      %v269 = vld [vmem:[#allocation7 + $0x28] sm:$0xff]
      %v270 = vld [vmem:[#allocation7 + $0x30] sm:$0xff]
      %v271 = vld [vmem:[#allocation7 + $0x38] sm:$0xff]
      %v272 = vld [vmem:[#allocation7 + $0x40] sm:$0xff]
      %v273 = vld [vmem:[#allocation9] sm:$0xff]
      %v274 = vld [vmem:[#allocation9 + $0x8] sm:$0xff]
      %v275 = vld [vmem:[#allocation9 + $0x10] sm:$0xff]
      %v276 = vld [vmem:[#allocation9 + $0x18] sm:$0xff]
      %v277 = vld [vmem:[#allocation9 + $0x20] sm:$0xff]
      %v278 = vld [vmem:[#allocation9 + $0x28] sm:$0xff]
      %v279 = vld [vmem:[#allocation9 + $0x30] sm:$0xff]
      %v280 = vld [vmem:[#allocation9 + $0x38] sm:$0xff]
      %v281 = vld [vmem:[#allocation9 + $0x40] sm:$0xff]
      %v282 = vsub.f32 %v255, %v264
      %v283 = vsub.f32 %v256, %v265
      %v284 = vsub.f32 %v257, %v266
      %v285 = vsub.f32 %v258, %v267
      %v286 = vsub.f32 %v259, %v268
      %v287 = vsub.f32 %v260, %v269
      %v288 = vsub.f32 %v261, %v270
      %v289 = vsub.f32 %v262, %v271
      %v290 = vsub.f32 %v263, %v272
      %v291 = vstv %s74
      %v292 = vmul.f32 %v255, %v291
      %v293 = vmul.f32 %v256, %v291
      %v294 = vmul.f32 %v257, %v291
      %v295 = vmul.f32 %v258, %v291
      %v296 = vmul.f32 %v259, %v291
      %v297 = vmul.f32 %v260, %v291
      %v298 = vmul.f32 %v261, %v291
      %v299 = vmul.f32 %v262, %v291
      %v300 = vmul.f32 %v263, %v291
      %v301 = vsub.f32 %v292, %v273
      %v302 = vsub.f32 %v293, %v274
      %v303 = vsub.f32 %v294, %v275
      %v304 = vsub.f32 %v295, %v276
      %v305 = vsub.f32 %v296, %v277
      %v306 = vsub.f32 %v297, %v278
      %v307 = vsub.f32 %v298, %v279
      %v308 = vsub.f32 %v299, %v280
      %v309 = vsub.f32 %v300, %v281
      %v310 = vlaneseq
      %v311 = vshrl.u32 %v310, 7
      %v312 = vadd.s32 %v311, 8
      %v313 = vadd.s32 %v311, 16
      %v314 = vadd.s32 %v311, 24
      %v315 = vadd.s32 %v311, 32
      %v316 = vadd.s32 %v311, 40
      %v317 = vadd.s32 %v311, 48
      %v318 = vadd.s32 %v311, 56
      %v319 = vadd.s32 %v311, 64
      %v320 = vstv %s77
      %v321 = vadd.s32 %v320, %v311
      %v322 = vadd.s32 %v320, %v312
      %v323 = vadd.s32 %v320, %v313
      %v324 = vadd.s32 %v320, %v314
      %v325 = vadd.s32 %v320, %v315
      %v326 = vadd.s32 %v320, %v316
      %v327 = vadd.s32 %v320, %v317
      %v328 = vadd.s32 %v320, %v318
      %v329 = vadd.s32 %v320, %v319
      %v330 = vstv %s75
      %vm331 = vcmp.lt.s32.totalorder %v321, %v330
      %vm332 = vcmp.lt.s32.totalorder %v322, %v330
      %vm333 = vcmp.lt.s32.totalorder %v323, %v330
      %vm334 = vcmp.lt.s32.totalorder %v324, %v330
      %vm335 = vcmp.lt.s32.totalorder %v325, %v330
      %vm336 = vcmp.lt.s32.totalorder %v326, %v330
      %vm337 = vcmp.lt.s32.totalorder %v327, %v330
      %vm338 = vcmp.lt.s32.totalorder %v328, %v330
      %vm339 = vcmp.lt.s32.totalorder %v329, %v330
      %v340 = vsel %vm331, %v282, 0.0
      %v341 = vsel %vm332, %v283, 0.0
      %v342 = vsel %vm333, %v284, 0.0
      %v343 = vsel %vm334, %v285, 0.0
      %v344 = vsel %vm335, %v286, 0.0
      %v345 = vsel %vm336, %v287, 0.0
      %v346 = vsel %vm337, %v288, 0.0
      %v347 = vsel %vm338, %v289, 0.0
      %v348 = vsel %vm339, %v290, 0.0
      %v349 = vsel %vm331, %v301, 0.0
      %v350 = vsel %vm332, %v302, 0.0
      %v351 = vsel %vm333, %v303, 0.0
      %v352 = vsel %vm334, %v304, 0.0
      %v353 = vsel %vm335, %v305, 0.0
      %v354 = vsel %vm336, %v306, 0.0
      %v355 = vsel %vm337, %v307, 0.0
      %v356 = vsel %vm338, %v308, 0.0
      %v357 = vsel %vm339, %v309, 0.0
      %v358 = vmul.f32 %v340, %v340
      %v359 = vmul.f32 %v341, %v341
      %v360 = vmul.f32 %v342, %v342
      %v361 = vmul.f32 %v343, %v343
      %v362 = vmul.f32 %v344, %v344
      %v363 = vmul.f32 %v345, %v345
      %v364 = vmul.f32 %v346, %v346
      %v365 = vmul.f32 %v347, %v347
      %v366 = vmul.f32 %v348, %v348
      %v367 = vadd.f32 %v358, %v359
      %v368 = vadd.f32 %v367, %v360
      %v369 = vadd.f32 %v368, %v361
      %v370 = vadd.f32 %v369, %v362
      %v371 = vadd.f32 %v370, %v363
      %v372 = vadd.f32 %v371, %v364
      %v373 = vadd.f32 %v372, %v365
      %v374 = vadd.f32 %v373, %v366
      %v375 = vadd.f32 %v374, 0.0
      %v376 = vand.u32 2147483647, %v340
      %v377 = vand.u32 2147483647, %v341
      %v378 = vand.u32 2147483647, %v342
      %v379 = vand.u32 2147483647, %v343
      %v380 = vand.u32 2147483647, %v344
      %v381 = vand.u32 2147483647, %v345
      %v382 = vand.u32 2147483647, %v346
      %v383 = vand.u32 2147483647, %v347
      %v384 = vand.u32 2147483647, %v348
      %v385 = vadd.f32 %v376, %v377
      %v386 = vadd.f32 %v385, %v378
      %v387 = vadd.f32 %v386, %v379
      %v388 = vadd.f32 %v387, %v380
      %v389 = vadd.f32 %v388, %v381
      %v390 = vadd.f32 %v389, %v382
      %v391 = vadd.f32 %v390, %v383
      %v392 = vadd.f32 %v391, %v384
      %v393 = vadd.f32 %v392, 0.0
      %v394 = vadd.f32 %v340, %v341
      %v395 = vadd.f32 %v394, %v342
      %v396 = vadd.f32 %v395, %v343
      %v397 = vadd.f32 %v396, %v344
      %v398 = vadd.f32 %v397, %v345
      %v399 = vadd.f32 %v398, %v346
      %v400 = vadd.f32 %v399, %v347
      %v401 = vadd.f32 %v400, %v348
      %v402 = vadd.f32 %v401, 0.0
      %v403 = vadd.f32 %v349, %v350
      %v404 = vadd.f32 %v403, %v351
      %v405 = vadd.f32 %v404, %v352
      %v406 = vadd.f32 %v405, %v353
      %v407 = vadd.f32 %v406, %v354
      %v408 = vadd.f32 %v407, %v355
      %v409 = vadd.f32 %v408, %v356
      %v410 = vadd.f32 %v409, %v357
      %v411 = vadd.f32 %v410, 0.0
      %v412 = vmul.f32 %v349, %v349
      %v413 = vmul.f32 %v350, %v350
      %v414 = vmul.f32 %v351, %v351
      %v415 = vmul.f32 %v352, %v352
      %v416 = vmul.f32 %v353, %v353
      %v417 = vmul.f32 %v354, %v354
      %v418 = vmul.f32 %v355, %v355
      %v419 = vmul.f32 %v356, %v356
      %v420 = vmul.f32 %v357, %v357
      %v421 = vadd.f32 %v412, %v413
      %v422 = vadd.f32 %v421, %v414
      %v423 = vadd.f32 %v422, %v415
      %v424 = vadd.f32 %v423, %v416
      %v425 = vadd.f32 %v424, %v417
      %v426 = vadd.f32 %v425, %v418
      %v427 = vadd.f32 %v426, %v419
      %v428 = vadd.f32 %v427, %v420
      %v429 = vadd.f32 %v428, 0.0
      %v430 = vmul.f32 %v349, %v340
      %v431 = vmul.f32 %v350, %v341
      %v432 = vmul.f32 %v351, %v342
      %v433 = vmul.f32 %v352, %v343
      %v434 = vmul.f32 %v353, %v344
      %v435 = vmul.f32 %v354, %v345
      %v436 = vmul.f32 %v355, %v346
      %v437 = vmul.f32 %v356, %v347
      %v438 = vmul.f32 %v357, %v348
      %v439 = vadd.f32 %v430, %v431
      %v440 = vadd.f32 %v439, %v432
      %v441 = vadd.f32 %v440, %v433
      %v442 = vadd.f32 %v441, %v434
      %v443 = vadd.f32 %v442, %v435
      %v444 = vadd.f32 %v443, %v436
      %v445 = vadd.f32 %v444, %v437
      %v446 = vadd.f32 %v445, %v438
      %v447 = vadd.f32 %v446, 0.0
      %v448 = vld [vmem:[#allocation10] sm:$0xff]
      %v449 = vadd.f32 %v448, %v375
      %450 = vst [vmem:[#allocation10] sm:$0xff] %v449
      %s451 = scalar_lea.vmem [#allocation10], 8
      %v452 = vld [vmem:[%s451] sm:$0xff]
      %v453 = vadd.f32 %v452, %v393
      %454 = vst [vmem:[%s451] sm:$0xff] %v453
      %s455 = scalar_lea.vmem [#allocation10], 16
      %v456 = vld [vmem:[%s455] sm:$0xff]
      %v457 = vadd.f32 %v456, %v402
      %458 = vst [vmem:[%s455] sm:$0xff] %v457
      %s459 = scalar_lea.vmem [#allocation10], 24
      %v460 = vld [vmem:[%s459] sm:$0xff]
      %v461 = vadd.f32 %v460, %v411
      %462 = vst [vmem:[%s459] sm:$0xff] %v461
      %s463 = scalar_lea.vmem [#allocation10], 32
      %v464 = vld [vmem:[%s463] sm:$0xff]
      %v465 = vadd.f32 %v464, %v429
      %466 = vst [vmem:[%s463] sm:$0xff] %v465
      %s467 = scalar_lea.vmem [#allocation10], 40
      %v468 = vld [vmem:[%s467] sm:$0xff]
      %v469 = vadd.f32 %v468, %v447
      %470 = vst [vmem:[%s467] sm:$0xff] %v469
    $region45: #{tpu_custom_call.1} parent=1 // pred_fallthru
      _
    // Predicated region
    $region46: #{tpu_custom_call.1} parent=1 // pred_check
      _
    $region47: #{tpu_custom_call.1} parent=1 // pred_check_branch
      %472 = sbr.rel (0) target = $region49
    $region48: #{tpu_custom_call.1} parent=1 // pred_region
      %s474 = ssub.s32 768, 768
      %475 = vsyncadd [#allocation6], %s474
      %s476 = sshll.u32 [#allocation10], 4
      %s477 = int_to_ptr.vmem [resolvable:$true] %s476
      %482 = dma.vmem_to_hbm [thread:$0]  %s477, 768, %s5, [#allocation6], 128, 128, 8
    $region49: #{tpu_custom_call.1} parent=1 // pred_fallthru
      _
    // Predicated region
    $region50: #{tpu_custom_call.1} parent=1 // pred_check
      _
    $region51: #{tpu_custom_call.1} parent=1 // pred_check_branch
      %484 = sbr.rel (0) target = $region53
    $region52: #{tpu_custom_call.1} parent=1 // pred_region
      %485 = dma.done [#allocation6], 768
    $region53: #{tpu_custom_call.1} parent=1 // pred_fallthru
      _
    %486 = vsyncpa [#allocation5], 1
    %487 = vsyncpa [#allocation8], 1
    %488 = vsyncpa [#allocation6], 1

</llo_original>
